<compile_context>
chip_gen: v5e
topology: v5e:2x2
jax: 0.10.0
libtpu: 0.0.40
codegen_flags: <defaults>
</compile_context>

<pallas_src>
import jax
import jax.numpy as jnp
from jax.experimental import pallas as pl
from jax.experimental.pallas import tpu as pltpu

# ----------------------------- hyper-parameters ------------------------------
B = 2              # batch
N_CHANS = 4        # EEG channels (conv2 spatial kernel height)
N_TIMES = 128      # time samples per batch element (lane axis)
F1 = 8             # feature maps
K1 = 25            # conv1 temporal kernel width
PAD = 12           # conv1 temporal padding
POOL_W = 75
POOL_S = 15
P_OUT = (N_TIMES - POOL_W) // POOL_S + 1   # pooled time steps (= 4)
FLAT = F1 * P_OUT                          # fc input features
N_CLASSES = 2

CF = N_CHANS * F1          # 32   conv1-output rows (c-major, f-minor)
KC = N_CHANS * K1          # 100  im2col rows       (c-major, k-minor)
K_ROWS = 128               # contraction padded to a full lane tile
LANES = 128
BT = B * N_TIMES           # 256  lane-packed batch*time

# parameter-slab row layout (sublane-stacked, 128 lanes wide)
W1_OFF = 0                          # (CF, 128)      block-diag conv1 w + bias col
W2_OFF = W1_OFF + CF                # (F1, 128)      conv2 weight in cols [0, CF)
FC_OFF = W2_OFF + F1                # (P_OUT*F1,128) fc weight at lane 2*b + j
BFC_ROW = FC_OFF + P_OUT * F1       # (1, 128)       fc bias at lane 2*b + j
PARAM_ROWS = ((BFC_ROW + 1 + 7) // 8) * 8            # = 80 (sublane multiple)


# --------------------------------- kernel ------------------------------------
def shallow_convnet_kernel(xcol_ref, params_ref, out_ref):
    """Single invocation (no grid); everything resident in VMEM.
       xcol_ref  : (K_ROWS, B*N_TIMES)  im2col rows c*K1+k; row KC == 1.0; rest 0
       params_ref: (PARAM_ROWS, 128)    packed parameter slab (row layout above)
       out_ref   : (1, 128)             logits[b, j] at lane 2*b + j, 0 elsewhere
    """
    # conv1 (+ bias folded into contraction row KC) + ReLU      -> (CF, B*T)
    h1 = jnp.maximum(
        jnp.dot(params_ref[W1_OFF:W1_OFF + CF, :], xcol_ref[...],
                preferred_element_type=jnp.float32), 0.0)

    # conv2 (EEG-channel reduction in the contraction) + ReLU   -> (F1, B*T)
    h2 = jnp.maximum(
        jnp.dot(params_ref[W2_OFF:W2_OFF + F1, 0:CF], h1,
                preferred_element_type=jnp.float32), 0.0)

    # TODO(synk): nn.Dropout is an inference-time no-op; not implemented.

    # MaxPool (1,75)/(1,15) fused with the fc layer.  Window membership is a
    # function of the in-batch time index (lane % 128); masked lanes are filled
    # with 0.0, which is exact because h2 is post-ReLU (>= 0).
    t_idx = jax.lax.broadcasted_iota(jnp.int32, (F1, N_TIMES), 1)
    lane_idx = jax.lax.broadcasted_iota(jnp.int32, (F1, LANES), 1)

    acc = jnp.zeros((F1, LANES), jnp.float32)
    for p in range(P_OUT):                                   # unrolled (P_OUT=4)
        win = (t_idx >= p * POOL_S) & (t_idx < p * POOL_S + POOL_W)
        m = None
        for b in range(B):                                   # unrolled (B=2)
            h2_b = h2[:, b * N_TIMES:(b + 1) * N_TIMES]      # 128-aligned vreg pick
            m_b = jnp.max(jnp.where(win, h2_b, 0.0), axis=1, keepdims=True)
            m = m_b if m is None else jnp.where(lane_idx < b * N_CLASSES, m, m_b)
        # fc weight slab has zeros outside lanes [0, B*N_CLASSES), so garbage in
        # the other lanes of `m` never reaches the output.
        acc = acc + m * params_ref[FC_OFF + p * F1:FC_OFF + (p + 1) * F1, :]

    out_ref[...] = (jnp.sum(acc, axis=0, keepdims=True)
                    + params_ref[BFC_ROW:BFC_ROW + 1, :])


# -------------------------------- wrapper -------------------------------------
def shallow_convnet_forward(x, params):
    """x: (B, N_CHANS, N_TIMES) float32.  params in torch-like canonical layouts."""
    w1, b1, w2, wfc, bfc = params
    f32 = jnp.float32

    # --- activations: im2col with the batch packed along lanes -> (128, 256) ---
    x_pad = jnp.pad(x, ((0, 0), (0, 0), (PAD, PAD)))
    cols = jnp.stack([x_pad[:, :, k:k + N_TIMES] for k in range(K1)], axis=2)
    xcol = cols.reshape(B, KC, N_TIMES)                        # row = c*K1 + k
    xcol = jnp.transpose(xcol, (1, 0, 2)).reshape(KC, BT)      # lane = b*T + t
    xcol = jnp.concatenate(
        [xcol,
         jnp.ones((1, BT), f32),                               # row KC: bias fold
         jnp.zeros((K_ROWS - KC - 1, BT), f32)], axis=0)       # (128, 256)

    # --- parameter slab (PARAM_ROWS, 128) --------------------------------------
    # conv1: block-diagonal weight (rows c*F1+f, cols c*K1+k); bias in column KC.
    w1bd = jnp.kron(jnp.eye(N_CHANS, dtype=f32), w1)           # (CF, KC)
    b1_col = jnp.tile(b1, N_CHANS).reshape(CF, 1)              # row c*F1+f -> b1[f]
    w1_rows = jnp.concatenate(
        [w1bd, b1_col, jnp.zeros((CF, K_ROWS - KC - 1), f32)], axis=1)  # (CF, 128)

    # conv2: (o, c*F1 + i), zero-padded to 128 lanes.
    w2_rows = jnp.pad(jnp.transpose(w2, (0, 2, 1)).reshape(F1, CF),
                      ((0, 0), (0, LANES - CF)))               # (F1, 128)

    # fc weight: slab[p*F1 + f, 2*b + j] = wfc[j, f*P_OUT + p] (torch flatten order).
    wfc_pfj = jnp.transpose(wfc.reshape(N_CLASSES, F1, P_OUT), (2, 1, 0))  # (P,F1,2)
    fc_rows = jnp.pad(jnp.tile(wfc_pfj, (1, 1, B)),
                      ((0, 0), (0, 0), (0, LANES - B * N_CLASSES)))
    fc_rows = fc_rows.reshape(P_OUT * F1, LANES)               # (32, 128)

    # fc bias at lane 2*b + j.
    bfc_row = jnp.pad(jnp.tile(bfc, B),
                      (0, LANES - B * N_CLASSES)).reshape(1, LANES)

    params_slab = jnp.concatenate(
        [w1_rows, w2_rows, fc_rows, bfc_row,
         jnp.zeros((PARAM_ROWS - BFC_ROW - 1, LANES), f32)], axis=0)  # (80, 128)

    out = pl.pallas_call(
        shallow_convnet_kernel,
        out_shape=jax.ShapeDtypeStruct((1, LANES), jnp.float32),
        in_specs=[pl.BlockSpec(memory_space=pltpu.MemorySpace.VMEM),
                  pl.BlockSpec(memory_space=pltpu.MemorySpace.VMEM)],
        out_specs=pl.BlockSpec(memory_space=pltpu.MemorySpace.VMEM),
    )(xcol, params_slab)

    # logits[b, j] lives at lane 2*b + j of the single lane-dense output row.
    return out[0, :B * N_CLASSES].reshape(B, N_CLASSES)


# ---------------------------- plain-JAX reference -----------------------------
def reference_forward(x, params):
    w1, b1, w2, wfc, bfc = params
    xp = jnp.pad(x, ((0, 0), (0, 0), (PAD, PAD)))
    cols = jnp.stack([xp[:, :, k:k + N_TIMES] for k in range(K1)], axis=-1)  # (B,C,T,K)
    h1 = jnp.einsum('bctk,fk->bfct', cols, w1,
                    precision='highest') + b1[None, :, None, None]
    h1 = jnp.maximum(h1, 0.0)
    h2 = jnp.einsum('bict,oic->bot', h1, w2, precision='highest')
    h2 = jnp.maximum(h2, 0.0)
    pooled = jnp.stack(
        [jnp.max(h2[:, :, p * POOL_S:p * POOL_S + POOL_W], axis=-1)
         for p in range(P_OUT)], axis=-1)                                     # (B,F1,P)
    flat = pooled.reshape(B, FLAT)
    return jnp.dot(flat, wfc.T, precision='highest') + bfc


# ----------------------------------- main --------------------------------------
def init_params(key):
    k1, k2, k3, k4, k5 = jax.random.split(key, 5)
    w1 = 0.2 * jax.random.normal(k1, (F1, K1), jnp.float32)           # conv1 weight[:,0,0,:]
    b1 = 0.1 * jax.random.normal(k2, (F1,), jnp.float32)              # conv1 bias
    w2 = 0.2 * jax.random.normal(k3, (F1, F1, N_CHANS), jnp.float32)  # conv2 weight[:,:,:,0]
    wfc = 0.2 * jax.random.normal(k4, (N_CLASSES, FLAT), jnp.float32)  # fc weight
    bfc = 0.1 * jax.random.normal(k5, (N_CLASSES,), jnp.float32)       # fc bias
    return w1, b1, w2, wfc, bfc


if __name__ == "__main__":
    root = jax.random.PRNGKey(0)
    kx, kp = jax.random.split(root)
    x = jax.random.normal(kx, (B, N_CHANS, N_TIMES), jnp.float32)
    params = init_params(kp)

    fwd = jax.jit(shallow_convnet_forward)
    out = jax.block_until_ready(fwd(x, params))
    ref = reference_forward(x, params)

    assert out.shape == (B, N_CLASSES)
    # Kernel matmuls run at default (bf16-multiplicand) MXU precision per the
    # perf review; 2e-2 comfortably bounds the resulting contraction error of
    # the <=101-term, O(1)-magnitude dot products vs the f32 'highest' reference.
    assert jnp.allclose(out, ref, rtol=2e-2, atol=2e-2), (out, ref, out - ref)

    print("KERNEL_OK")
</pallas_src>

<mosaic_0001>
module attributes {stable_mosaic.version = 11 : i64} {
  func.func @shallow_convnet_kernel(%arg0: memref<128x256xf32, #tpu.memory_space<vmem>>, %arg1: memref<80x128xf32, #tpu.memory_space<vmem>>, %arg2: memref<1x128xf32, #tpu.memory_space<vmem>>) attributes {dimension_semantics = [], scalar_prefetch = 0 : i64, scratch_operands = 0 : i64, tpu.core_type = #tpu.core_type<tc>} {
    %c0 = arith.constant 0 : index
    %c0_0 = arith.constant 0 : index
    %0 = vector.load %arg1[%c0, %c0_0] : memref<80x128xf32, #tpu.memory_space<vmem>>, vector<32x128xf32>
    %c0_1 = arith.constant 0 : index
    %c0_2 = arith.constant 0 : index
    %1 = vector.load %arg0[%c0_1, %c0_2] : memref<128x256xf32, #tpu.memory_space<vmem>>, vector<128x256xf32>
    %cst = arith.constant dense<0.000000e+00> : vector<32x256xf32>
    %2 = tpu.matmul %0, %1, %cst {dimension_numbers = #tpu.dot_dimension_numbers<[1], [0], [0], [1], [0, 0, 1, 1], [], []>} : vector<32x128xf32>, vector<128x256xf32>, vector<32x256xf32> -> vector<32x256xf32>
    %cst_3 = arith.constant 0.000000e+00 : f32
    %3 = vector.broadcast %cst_3 : f32 to vector<32x256xf32>
    %4 = arith.maximumf %2, %3 : vector<32x256xf32>
    %c32 = arith.constant 32 : index
    %c0_4 = arith.constant 0 : index
    %5 = vector.load %arg1[%c32, %c0_4] : memref<80x128xf32, #tpu.memory_space<vmem>>, vector<8x32xf32>
    %cst_5 = arith.constant dense<0.000000e+00> : vector<8x256xf32>
    %6 = tpu.matmul %5, %4, %cst_5 {dimension_numbers = #tpu.dot_dimension_numbers<[1], [0], [0], [1], [0, 0, 1, 1], [], []>} : vector<8x32xf32>, vector<32x256xf32>, vector<8x256xf32> -> vector<8x256xf32>
    %cst_6 = arith.constant 0.000000e+00 : f32
    %7 = vector.broadcast %cst_6 : f32 to vector<8x256xf32>
    %8 = arith.maximumf %6, %7 : vector<8x256xf32>
    %9 = tpu.iota {dimensions = array<i32: 1>} : vector<8x128xi32>
    %10 = tpu.iota {dimensions = array<i32: 1>} : vector<8x128xi32>
    %cst_7 = arith.constant 0.000000e+00 : f32
    %11 = vector.broadcast %cst_7 : f32 to vector<8x128xf32>
    %c0_i32 = arith.constant 0 : i32
    %12 = vector.broadcast %c0_i32 : i32 to vector<8x128xi32>
    %13 = arith.cmpi sge, %9, %12 : vector<8x128xi32>
    %c75_i32 = arith.constant 75 : i32
    %14 = vector.broadcast %c75_i32 : i32 to vector<8x128xi32>
    %15 = arith.cmpi slt, %9, %14 : vector<8x128xi32>
    %16 = arith.andi %13, %15 : vector<8x128xi1>
    %17 = vector.extract_strided_slice %8 {offsets = [0, 0], sizes = [8, 128], strides = [1, 1]} : vector<8x256xf32> to vector<8x128xf32>
    %cst_8 = arith.constant 0.000000e+00 : f32
    %18 = vector.broadcast %cst_8 : f32 to vector<8x128xf32>
    %19 = arith.select %16, %17, %18 : vector<8x128xi1>, vector<8x128xf32>
    %cst_9 = arith.constant dense<0xFF800000> : vector<8xf32>
    %20 = vector.multi_reduction <maximumf>, %19, %cst_9 [1] : vector<8x128xf32> to vector<8xf32>
    %21 = vector.shape_cast %20 : vector<8xf32> to vector<8x1xf32>
    %22 = vector.extract_strided_slice %8 {offsets = [0, 128], sizes = [8, 128], strides = [1, 1]} : vector<8x256xf32> to vector<8x128xf32>
    %cst_10 = arith.constant 0.000000e+00 : f32
    %23 = vector.broadcast %cst_10 : f32 to vector<8x128xf32>
    %24 = arith.select %16, %22, %23 : vector<8x128xi1>, vector<8x128xf32>
    %cst_11 = arith.constant dense<0xFF800000> : vector<8xf32>
    %25 = vector.multi_reduction <maximumf>, %24, %cst_11 [1] : vector<8x128xf32> to vector<8xf32>
    %26 = vector.shape_cast %25 : vector<8xf32> to vector<8x1xf32>
    %c2_i32 = arith.constant 2 : i32
    %27 = vector.broadcast %c2_i32 : i32 to vector<8x128xi32>
    %28 = arith.cmpi slt, %10, %27 : vector<8x128xi32>
    %29 = vector.shape_cast %21 : vector<8x1xf32> to vector<8x1xf32>
    %30 = vector.broadcast %29 : vector<8x1xf32> to vector<8x128xf32>
    %31 = vector.shape_cast %26 : vector<8x1xf32> to vector<8x1xf32>
    %32 = vector.broadcast %31 : vector<8x1xf32> to vector<8x128xf32>
    %33 = arith.select %28, %30, %32 : vector<8x128xi1>, vector<8x128xf32>
    %c40 = arith.constant 40 : index
    %c0_12 = arith.constant 0 : index
    %34 = vector.load %arg1[%c40, %c0_12] : memref<80x128xf32, #tpu.memory_space<vmem>>, vector<8x128xf32>
    %35 = arith.mulf %33, %34 : vector<8x128xf32>
    %36 = arith.addf %11, %35 : vector<8x128xf32>
    %c15_i32 = arith.constant 15 : i32
    %37 = vector.broadcast %c15_i32 : i32 to vector<8x128xi32>
    %38 = arith.cmpi sge, %9, %37 : vector<8x128xi32>
    %c90_i32 = arith.constant 90 : i32
    %39 = vector.broadcast %c90_i32 : i32 to vector<8x128xi32>
    %40 = arith.cmpi slt, %9, %39 : vector<8x128xi32>
    %41 = arith.andi %38, %40 : vector<8x128xi1>
    %42 = vector.extract_strided_slice %8 {offsets = [0, 0], sizes = [8, 128], strides = [1, 1]} : vector<8x256xf32> to vector<8x128xf32>
    %cst_13 = arith.constant 0.000000e+00 : f32
    %43 = vector.broadcast %cst_13 : f32 to vector<8x128xf32>
    %44 = arith.select %41, %42, %43 : vector<8x128xi1>, vector<8x128xf32>
    %cst_14 = arith.constant dense<0xFF800000> : vector<8xf32>
    %45 = vector.multi_reduction <maximumf>, %44, %cst_14 [1] : vector<8x128xf32> to vector<8xf32>
    %46 = vector.shape_cast %45 : vector<8xf32> to vector<8x1xf32>
    %47 = vector.extract_strided_slice %8 {offsets = [0, 128], sizes = [8, 128], strides = [1, 1]} : vector<8x256xf32> to vector<8x128xf32>
    %cst_15 = arith.constant 0.000000e+00 : f32
    %48 = vector.broadcast %cst_15 : f32 to vector<8x128xf32>
    %49 = arith.select %41, %47, %48 : vector<8x128xi1>, vector<8x128xf32>
    %cst_16 = arith.constant dense<0xFF800000> : vector<8xf32>
    %50 = vector.multi_reduction <maximumf>, %49, %cst_16 [1] : vector<8x128xf32> to vector<8xf32>
    %51 = vector.shape_cast %50 : vector<8xf32> to vector<8x1xf32>
    %c2_i32_17 = arith.constant 2 : i32
    %52 = vector.broadcast %c2_i32_17 : i32 to vector<8x128xi32>
    %53 = arith.cmpi slt, %10, %52 : vector<8x128xi32>
    %54 = vector.shape_cast %46 : vector<8x1xf32> to vector<8x1xf32>
    %55 = vector.broadcast %54 : vector<8x1xf32> to vector<8x128xf32>
    %56 = vector.shape_cast %51 : vector<8x1xf32> to vector<8x1xf32>
    %57 = vector.broadcast %56 : vector<8x1xf32> to vector<8x128xf32>
    %58 = arith.select %53, %55, %57 : vector<8x128xi1>, vector<8x128xf32>
    %c48 = arith.constant 48 : index
    %c0_18 = arith.constant 0 : index
    %59 = vector.load %arg1[%c48, %c0_18] : memref<80x128xf32, #tpu.memory_space<vmem>>, vector<8x128xf32>
    %60 = arith.mulf %58, %59 : vector<8x128xf32>
    %61 = arith.addf %36, %60 : vector<8x128xf32>
    %c30_i32 = arith.constant 30 : i32
    %62 = vector.broadcast %c30_i32 : i32 to vector<8x128xi32>
    %63 = arith.cmpi sge, %9, %62 : vector<8x128xi32>
    %c105_i32 = arith.constant 105 : i32
    %64 = vector.broadcast %c105_i32 : i32 to vector<8x128xi32>
    %65 = arith.cmpi slt, %9, %64 : vector<8x128xi32>
    %66 = arith.andi %63, %65 : vector<8x128xi1>
    %67 = vector.extract_strided_slice %8 {offsets = [0, 0], sizes = [8, 128], strides = [1, 1]} : vector<8x256xf32> to vector<8x128xf32>
    %cst_19 = arith.constant 0.000000e+00 : f32
    %68 = vector.broadcast %cst_19 : f32 to vector<8x128xf32>
    %69 = arith.select %66, %67, %68 : vector<8x128xi1>, vector<8x128xf32>
    %cst_20 = arith.constant dense<0xFF800000> : vector<8xf32>
    %70 = vector.multi_reduction <maximumf>, %69, %cst_20 [1] : vector<8x128xf32> to vector<8xf32>
    %71 = vector.shape_cast %70 : vector<8xf32> to vector<8x1xf32>
    %72 = vector.extract_strided_slice %8 {offsets = [0, 128], sizes = [8, 128], strides = [1, 1]} : vector<8x256xf32> to vector<8x128xf32>
    %cst_21 = arith.constant 0.000000e+00 : f32
    %73 = vector.broadcast %cst_21 : f32 to vector<8x128xf32>
    %74 = arith.select %66, %72, %73 : vector<8x128xi1>, vector<8x128xf32>
    %cst_22 = arith.constant dense<0xFF800000> : vector<8xf32>
    %75 = vector.multi_reduction <maximumf>, %74, %cst_22 [1] : vector<8x128xf32> to vector<8xf32>
    %76 = vector.shape_cast %75 : vector<8xf32> to vector<8x1xf32>
    %c2_i32_23 = arith.constant 2 : i32
    %77 = vector.broadcast %c2_i32_23 : i32 to vector<8x128xi32>
    %78 = arith.cmpi slt, %10, %77 : vector<8x128xi32>
    %79 = vector.shape_cast %71 : vector<8x1xf32> to vector<8x1xf32>
    %80 = vector.broadcast %79 : vector<8x1xf32> to vector<8x128xf32>
    %81 = vector.shape_cast %76 : vector<8x1xf32> to vector<8x1xf32>
    %82 = vector.broadcast %81 : vector<8x1xf32> to vector<8x128xf32>
    %83 = arith.select %78, %80, %82 : vector<8x128xi1>, vector<8x128xf32>
    %c56 = arith.constant 56 : index
    %c0_24 = arith.constant 0 : index
    %84 = vector.load %arg1[%c56, %c0_24] : memref<80x128xf32, #tpu.memory_space<vmem>>, vector<8x128xf32>
    %85 = arith.mulf %83, %84 : vector<8x128xf32>
    %86 = arith.addf %61, %85 : vector<8x128xf32>
    %c45_i32 = arith.constant 45 : i32
    %87 = vector.broadcast %c45_i32 : i32 to vector<8x128xi32>
    %88 = arith.cmpi sge, %9, %87 : vector<8x128xi32>
    %c120_i32 = arith.constant 120 : i32
    %89 = vector.broadcast %c120_i32 : i32 to vector<8x128xi32>
    %90 = arith.cmpi slt, %9, %89 : vector<8x128xi32>
    %91 = arith.andi %88, %90 : vector<8x128xi1>
    %92 = vector.extract_strided_slice %8 {offsets = [0, 0], sizes = [8, 128], strides = [1, 1]} : vector<8x256xf32> to vector<8x128xf32>
    %cst_25 = arith.constant 0.000000e+00 : f32
    %93 = vector.broadcast %cst_25 : f32 to vector<8x128xf32>
    %94 = arith.select %91, %92, %93 : vector<8x128xi1>, vector<8x128xf32>
    %cst_26 = arith.constant dense<0xFF800000> : vector<8xf32>
    %95 = vector.multi_reduction <maximumf>, %94, %cst_26 [1] : vector<8x128xf32> to vector<8xf32>
    %96 = vector.shape_cast %95 : vector<8xf32> to vector<8x1xf32>
    %97 = vector.extract_strided_slice %8 {offsets = [0, 128], sizes = [8, 128], strides = [1, 1]} : vector<8x256xf32> to vector<8x128xf32>
    %cst_27 = arith.constant 0.000000e+00 : f32
    %98 = vector.broadcast %cst_27 : f32 to vector<8x128xf32>
    %99 = arith.select %91, %97, %98 : vector<8x128xi1>, vector<8x128xf32>
    %cst_28 = arith.constant dense<0xFF800000> : vector<8xf32>
    %100 = vector.multi_reduction <maximumf>, %99, %cst_28 [1] : vector<8x128xf32> to vector<8xf32>
    %101 = vector.shape_cast %100 : vector<8xf32> to vector<8x1xf32>
    %c2_i32_29 = arith.constant 2 : i32
    %102 = vector.broadcast %c2_i32_29 : i32 to vector<8x128xi32>
    %103 = arith.cmpi slt, %10, %102 : vector<8x128xi32>
    %104 = vector.shape_cast %96 : vector<8x1xf32> to vector<8x1xf32>
    %105 = vector.broadcast %104 : vector<8x1xf32> to vector<8x128xf32>
    %106 = vector.shape_cast %101 : vector<8x1xf32> to vector<8x1xf32>
    %107 = vector.broadcast %106 : vector<8x1xf32> to vector<8x128xf32>
    %108 = arith.select %103, %105, %107 : vector<8x128xi1>, vector<8x128xf32>
    %c64 = arith.constant 64 : index
    %c0_30 = arith.constant 0 : index
    %109 = vector.load %arg1[%c64, %c0_30] : memref<80x128xf32, #tpu.memory_space<vmem>>, vector<8x128xf32>
    %110 = arith.mulf %108, %109 : vector<8x128xf32>
    %111 = arith.addf %86, %110 : vector<8x128xf32>
    %cst_31 = arith.constant dense<0.000000e+00> : vector<128xf32>
    %112 = vector.multi_reduction <add>, %111, %cst_31 [0] : vector<8x128xf32> to vector<128xf32>
    %113 = vector.shape_cast %112 : vector<128xf32> to vector<1x128xf32>
    %c72 = arith.constant 72 : index
    %c0_32 = arith.constant 0 : index
    %114 = vector.load %arg1[%c72, %c0_32] : memref<80x128xf32, #tpu.memory_space<vmem>>, vector<1x128xf32>
    %115 = arith.addf %113, %114 : vector<1x128xf32>
    %c0_33 = arith.constant 0 : index
    %c0_34 = arith.constant 0 : index
    %116 = vector.load %arg2[%c0_33, %c0_34] : memref<1x128xf32, #tpu.memory_space<vmem>>, vector<1x128xf32>
    tpu.vector_store %arg2[%c0_33, %c0_34], %115 {strides = array<i32>} : memref<1x128xf32, #tpu.memory_space<vmem>>, vector<1x128xf32>,
    return
  }
}

</mosaic_0001>

<llo_original>
// kernel: tile.18
$region0: #{tile.18}
  #allocation0 [shape = 's32[1]{0}', space=sflag, size = 0x4, scoped, tag = 'scoped memory for tile.18']
  %s0 = inlined_call_operand.vmem [shape: f32[8], index: 0, kind: input, shape index: {}]
  %s1 = inlined_call_operand.vmem [shape: f32[4,8], index: 1, kind: output, shape index: {}]
  // Predicated region
  $region2: #{tile.18} parent=0 // pred_check
    _
  $region3: #{tile.18} parent=0 // pred_check_branch
    %3 = sbr.rel (0) target = $region5
  $region4: #{tile.18} parent=0 // pred_region
    _
  $region5: #{tile.18} parent=0 // pred_fallthru
    _
  %v4 = vld [vmem:[%s0] ss:$0 sm:$0xff]
  %5 = vst [vmem:[%s1] sm:$0xf] %v4

// kernel: tile.0
$region0: #{tile.0}
  %s0 = inlined_call_operand.vmem [shape: f32[4,8], index: 0, kind: input, shape index: {}]
  %s1 = inlined_call_operand.vmem [shape: f32[32,1], index: 1, kind: output, shape index: {}]
  $region1: #{tile.0} parent=0
    #allocation0 [shape = 'u8[4096]{0}', space=vmem, size = 0x1000, scoped, tag = 'scoped mem for input reshape']
    %s3 = ssub.s32 16, 1
    %v4 = vld [vmem:[%s0] sm:%s3]
    %5 = vst [vmem:[#allocation0] sm:%s3] %v4
    %v6 = vld [vmem:[#allocation0] sm:$0xf]
    %vm7 = vcmask 7168
    %8 = vst.msk [vmem:[%s1] ss:$8 sm:$0xf] %vm7, %v6
    %v9 = vld [vmem:[#allocation0] sm:$0xf]
    %10 = vrot.lane.b32.xlu0 %v9, 127
    %v11 = vpop.permute.xlu0 %10
    %vm12 = vcmask 7168
    %s13 = scalar_lea.vmem %s1, 1
    %14 = vst.msk [vmem:[%s13] ss:$8 sm:$0xf] %vm12, %v11
    %v15 = vld [vmem:[#allocation0] sm:$0xf]
    %16 = vrot.lane.b32.xlu0 %v15, 126
    %v17 = vpop.permute.xlu0 %16
    %vm18 = vcmask 7168
    %s19 = scalar_lea.vmem %s1, 2
    %20 = vst.msk [vmem:[%s19] ss:$8 sm:$0xf] %vm18, %v17
    %v21 = vld [vmem:[#allocation0] sm:$0xf]
    %22 = vrot.lane.b32.xlu0 %v21, 125
    %v23 = vpop.permute.xlu0 %22
    %vm24 = vcmask 7168
    %s25 = scalar_lea.vmem %s1, 3
    %26 = vst.msk [vmem:[%s25] ss:$8 sm:$0xf] %vm24, %v23
    %v27 = vld [vmem:[#allocation0] sm:$0xf]
    %28 = vrot.lane.b32.xlu0 %v27, 124
    %v29 = vpop.permute.xlu0 %28
    %vm30 = vcmask 7168
    %s31 = scalar_lea.vmem %s1, 4
    %32 = vst.msk [vmem:[%s31] ss:$8 sm:$0xf] %vm30, %v29
    %v33 = vld [vmem:[#allocation0] sm:$0xf]
    %34 = vrot.lane.b32.xlu0 %v33, 123
    %v35 = vpop.permute.xlu0 %34
    %vm36 = vcmask 7168
    %s37 = scalar_lea.vmem %s1, 5
    %38 = vst.msk [vmem:[%s37] ss:$8 sm:$0xf] %vm36, %v35
    %v39 = vld [vmem:[#allocation0] sm:$0xf]
    %40 = vrot.lane.b32.xlu0 %v39, 122
    %v41 = vpop.permute.xlu0 %40
    %vm42 = vcmask 7168
    %s43 = scalar_lea.vmem %s1, 6
    %44 = vst.msk [vmem:[%s43] ss:$8 sm:$0xf] %vm42, %v41
    %v45 = vld [vmem:[#allocation0] sm:$0xf]
    %46 = vrot.lane.b32.xlu0 %v45, 121
    %v47 = vpop.permute.xlu0 %46
    %vm48 = vcmask 7168
    %s49 = scalar_lea.vmem %s1, 7
    %50 = vst.msk [vmem:[%s49] ss:$8 sm:$0xf] %vm48, %v47

// kernel: tile.28
$region0: #{tile.28}
  #allocation0 [shape = 's32[1]{0}', space=sflag, size = 0x4, scoped, tag = 'scoped memory for tile.28']
  %s0 = inlined_call_operand.vmem [shape: f32[2], index: 0, kind: input, shape index: {}]
  %s1 = inlined_call_operand.vmem [shape: f32[2,2], index: 1, kind: output, shape index: {}]
  // Predicated region
  $region2: #{tile.28} parent=0 // pred_check
    _
  $region3: #{tile.28} parent=0 // pred_check_branch
    %3 = sbr.rel (0) target = $region5
  $region4: #{tile.28} parent=0 // pred_region
    _
  $region5: #{tile.28} parent=0 // pred_fallthru
    _
  %v4 = vld [vmem:[%s0] ss:$0 sm:$0xff]
  %5 = vst [vmem:[%s1] sm:$0x3] %v4

// kernel: tile.29
$region0: #{tile.29}
  %s0 = inlined_call_operand.vmem [shape: f32[2,2], index: 0, kind: input, shape index: {}]
  %s1 = inlined_call_operand.vmem [shape: f32[4], index: 1, kind: output, shape index: {}]
  $region1: #{tile.29} parent=0
    #allocation0 [shape = 'u8[4096]{0}', space=vmem, size = 0x1000, scoped, tag = 'scoped mem for output reshape']
    #allocation1 [shape = 'u8[4096]{0}', space=vmem, size = 0x1000, scoped, tag = 'scoped mem for input reshape']
    %s3 = ssub.s32 4, 1
    %v4 = vld [vmem:[%s0] sm:%s3]
    %5 = vst [vmem:[#allocation1] sm:%s3] %v4
    %v6 = vld [vmem:[#allocation1] sm:$0x1]
    %vm7 = vcmask 15360
    %8 = vst.msk [vmem:[#allocation0] sm:$0x1] %vm7, %v6
    %s9 = scalar_lea.vmem [#allocation1], 1
    %v10 = vld [vmem:[%s9] sm:$0x1]
    %11 = vrot.lane.b32.xlu0 %v10, 2
    %v12 = vpop.permute.xlu0 %11
    %vm13 = vcmask 31760
    %14 = vst.msk [vmem:[#allocation0] sm:$0x1] %vm13, %v12
    %s16 = ssub.s32 2, 1
    %v17 = vld [vmem:[#allocation0] sm:%s16]
    %s19 = ssub.s32 2, 1
    %20 = vst [vmem:[%s1] sm:%s19] %v17

// kernel: squeeze.1
$region0: #{squeeze.1}
  %s0 = inlined_call_operand.vmem [shape: f32[4], index: 0, kind: input, shape index: {}]
  %s1 = inlined_call_operand.hbm [shape: f32[2,2], index: 1, kind: output, shape index: {}]
  $region1: #{squeeze.1} parent=0
    #allocation0 [shape = 'u8[1024]{0}', space=vmem, size = 0x400, scoped, tag = 'operand span for operand 1']
    #allocation1 [shape = 's32[1]{0}', space=sflag, size = 0x4, scoped, tag = 'scoped memory for squeeze.1']
    #allocation2 [shape = 'u8[4096]{0}', space=vmem, size = 0x1000, scoped, tag = 'scoped mem for output reshape']
    #allocation3 [shape = 'u8[4096]{0}', space=vmem, size = 0x1000, scoped, tag = 'scoped mem for input reshape']
    %2 = vsyncpa [#allocation1], 0
    %s4 = ssub.s32 2, 1
    %v5 = vld [vmem:[%s0] sm:%s4]
    %6 = vst [vmem:[#allocation3] sm:%s4] %v5
    %v7 = vld [vmem:[#allocation3] sm:$0x1]
    %vm8 = vcmask 15360
    %9 = vst.msk [vmem:[#allocation2] sm:$0x1] %vm8, %v7
    %v10 = vld [vmem:[#allocation3] sm:$0x1]
    %11 = vrot.lane.b32.xlu0 %v10, 126
    %v12 = vpop.permute.xlu0 %11
    %vm13 = vcmask 15360
    %s14 = scalar_lea.vmem [#allocation2], 1
    %15 = vst.msk [vmem:[%s14] sm:$0x1] %vm13, %v12
    %s17 = ssub.s32 4, 1
    %v18 = vld [vmem:[#allocation2] sm:%s17]
    %s20 = ssub.s32 4, 1
    %21 = vst [vmem:[#allocation0] sm:%s20] %v18
    %23 = vsyncadd [#allocation1], 0
    %s25 = sshll.u32 [#allocation0], 4
    %s26 = int_to_ptr.vmem [resolvable:$true] %s25
    %s27 = sshll.u32 %s1, 4
    %s28 = int_to_ptr.hbm [resolvable:$true] %s27
    %30 = dma.vmem_to_hbm [thread:$0]  %s26, 32, %s28, [#allocation1]
    %32 = dma.done [#allocation1], 32
    %33 = vsyncpa [#allocation1], 1

// kernel: shallow_convnet_forward.1
$region0: #{shallow_convnet_forward.1}
  #allocation0 [shape = 'u32[]', space=smem, size = 0x4, offset = 0x4, fixed_abs, tag = 'smem constant byte address 0x4 - core index']
  #allocation1 [shape = 'u32[72,128]{1,0:T(1,128)}', space=vmem, size = 0x9000, scoped, tag = 'internal scratch']
  %s0 = inlined_call_operand.vmem [shape: f32[128,256], index: 0, kind: input, shape index: {}]
  %s1 = inlined_call_operand.vmem [shape: f32[80,128], index: 1, kind: input, shape index: {}]
  %s2 = inlined_call_operand.vmem [shape: f32[1,128], index: 2, kind: output, shape index: {}]
  %s3 = sld [smem:[#allocation0]]
  $region18: #{shallow_convnet_forward.1} parent=0
    _
  %s5 = ssub.s32 1, %s3
  %s6 = scalar_select 0, %s5, %s3
  // Predicated region
  $region2: #{shallow_convnet_forward.1} parent=0 // pred_check
    _
  $region3: #{shallow_convnet_forward.1} parent=0 // pred_check_branch
    %8 = sbr.rel (0) target = $region5
  $region4: #{shallow_convnet_forward.1} parent=0 // pred_region
    _
  $region5: #{shallow_convnet_forward.1} parent=0 // pred_fallthru
    _
  // Predicated region
  $region6: #{shallow_convnet_forward.1} parent=0 // pred_check
    _
  $region7: #{shallow_convnet_forward.1} parent=0 // pred_check_branch
    %10 = sbr.rel (0) target = $region9
  $region8: #{shallow_convnet_forward.1} parent=0 // pred_region
    _
  $region9: #{shallow_convnet_forward.1} parent=0 // pred_fallthru
    _
  %v11 = vld [vmem:[%s1] sm:$0xff]
  %v12 = vld [vmem:[%s1 + $0x8] sm:$0xff]
  %v13 = vld [vmem:[%s1 + $0x10] sm:$0xff]
  %v14 = vld [vmem:[%s1 + $0x18] sm:$0xff]
  %v15 = vld [vmem:[%s0] sm:$0xff]
  %v16 = vld [vmem:[%s0 + $0x8] sm:$0xff]
  %v17 = vld [vmem:[%s0 + $0x10] sm:$0xff]
  %v18 = vld [vmem:[%s0 + $0x18] sm:$0xff]
  %v19 = vld [vmem:[%s0 + $0x20] sm:$0xff]
  %v20 = vld [vmem:[%s0 + $0x28] sm:$0xff]
  %v21 = vld [vmem:[%s0 + $0x30] sm:$0xff]
  %v22 = vld [vmem:[%s0 + $0x38] sm:$0xff]
  %v23 = vld [vmem:[%s0 + $0x40] sm:$0xff]
  %v24 = vld [vmem:[%s0 + $0x48] sm:$0xff]
  %v25 = vld [vmem:[%s0 + $0x50] sm:$0xff]
  %v26 = vld [vmem:[%s0 + $0x58] sm:$0xff]
  %v27 = vld [vmem:[%s0 + $0x60] sm:$0xff]
  %v28 = vld [vmem:[%s0 + $0x68] sm:$0xff]
  %v29 = vld [vmem:[%s0 + $0x70] sm:$0xff]
  %v30 = vld [vmem:[%s0 + $0x78] sm:$0xff]
  %v31 = vld [vmem:[%s0 + $0x80] sm:$0xff]
  %v32 = vld [vmem:[%s0 + $0x88] sm:$0xff]
  %v33 = vld [vmem:[%s0 + $0x90] sm:$0xff]
  %v34 = vld [vmem:[%s0 + $0x98] sm:$0xff]
  %v35 = vld [vmem:[%s0 + $0xa0] sm:$0xff]
  %v36 = vld [vmem:[%s0 + $0xa8] sm:$0xff]
  %v37 = vld [vmem:[%s0 + $0xb0] sm:$0xff]
  %v38 = vld [vmem:[%s0 + $0xb8] sm:$0xff]
  %v39 = vld [vmem:[%s0 + $0xc0] sm:$0xff]
  %v40 = vld [vmem:[%s0 + $0xc8] sm:$0xff]
  %v41 = vld [vmem:[%s0 + $0xd0] sm:$0xff]
  %v42 = vld [vmem:[%s0 + $0xd8] sm:$0xff]
  %v43 = vld [vmem:[%s0 + $0xe0] sm:$0xff]
  %v44 = vld [vmem:[%s0 + $0xe8] sm:$0xff]
  %v45 = vld [vmem:[%s0 + $0xf0] sm:$0xff]
  %v46 = vld [vmem:[%s0 + $0xf8] sm:$0xff]
  %47 = vmatpush.msra.mxu0 %v45
  %48 = vmatpush.msra.mxu0 %v43
  %49 = vmatpush.msra.mxu0 %v41
  %50 = vmatpush.msra.mxu0 %v39
  %51 = vmatpush.msra.mxu0 %v37
  %52 = vmatpush.msra.mxu0 %v35
  %53 = vmatpush.msra.mxu0 %v33
  %54 = vmatpush.msra.mxu0 %v31
  %55 = vmatpush.msra.mxu0 %v29
  %56 = vmatpush.msra.mxu0 %v27
  %57 = vmatpush.msra.mxu0 %v25
  %58 = vmatpush.msra.mxu0 %v23
  %59 = vmatpush.msra.mxu0 %v21
  %60 = vmatpush.msra.mxu0 %v19
  %61 = vmatpush.msra.mxu0 %v17
  %62 = vmatpush.msra.mxu0 %v15
  %63 = vmatmul.f32.gmra.mxu0 %v11
  %v64 = vpop.f32.mrf.mxu0
  %v65 = vadd.f32 0.0, %v64
  %66 = vmatmul.f32.gmra.mxu0 %v12
  %v67 = vpop.f32.mrf.mxu0
  %v68 = vadd.f32 0.0, %v67
  %69 = vmatmul.f32.gmra.mxu0 %v13
  %v70 = vpop.f32.mrf.mxu0
  %v71 = vadd.f32 0.0, %v70
  %72 = vmatmul.f32.gmra.mxu0 %v14
  %v73 = vpop.f32.mrf.mxu0
  %v74 = vadd.f32 0.0, %v73
  %75 = vdwg.mxu0
  %76 = vmatpush.msra.mxu0 %v46
  %77 = vmatpush.msra.mxu0 %v44
  %78 = vmatpush.msra.mxu0 %v42
  %79 = vmatpush.msra.mxu0 %v40
  %80 = vmatpush.msra.mxu0 %v38
  %81 = vmatpush.msra.mxu0 %v36
  %82 = vmatpush.msra.mxu0 %v34
  %83 = vmatpush.msra.mxu0 %v32
  %84 = vmatpush.msra.mxu0 %v30
  %85 = vmatpush.msra.mxu0 %v28
  %86 = vmatpush.msra.mxu0 %v26
  %87 = vmatpush.msra.mxu0 %v24
  %88 = vmatpush.msra.mxu0 %v22
  %89 = vmatpush.msra.mxu0 %v20
  %90 = vmatpush.msra.mxu0 %v18
  %91 = vmatpush.msra.mxu0 %v16
  %92 = vmatmul.f32.gmra.mxu0 %v11
  %v93 = vpop.f32.mrf.mxu0
  %v94 = vadd.f32 0.0, %v93
  %95 = vmatmul.f32.gmra.mxu0 %v12
  %v96 = vpop.f32.mrf.mxu0
  %v97 = vadd.f32 0.0, %v96
  %98 = vmatmul.f32.gmra.mxu0 %v13
  %v99 = vpop.f32.mrf.mxu0
  %v100 = vadd.f32 0.0, %v99
  %101 = vmatmul.f32.gmra.mxu0 %v14
  %v102 = vpop.f32.mrf.mxu0
  %v103 = vadd.f32 0.0, %v102
  %104 = vdwg.mxu0
  %v105 = vmax.f32 %v65, 0.0
  %v106 = vmax.f32 %v94, 0.0
  %v107 = vmax.f32 %v68, 0.0
  %v108 = vmax.f32 %v97, 0.0
  %v109 = vmax.f32 %v71, 0.0
  %v110 = vmax.f32 %v100, 0.0
  %v111 = vmax.f32 %v74, 0.0
  %v112 = vmax.f32 %v103, 0.0
  %v113 = vld [vmem:[%s1 + $0x20] sm:$0xff]
  %vm114 = vcmask 261120
  %v116 = vsel %vm114, %v113, 0
  %118 = vmatpush.msra.mxu0 0.0
  %119 = vmatpush.msra.mxu0 0.0
  %120 = vmatpush.msra.mxu0 0.0
  %121 = vmatpush.msra.mxu0 0.0
  %122 = vmatpush.msra.mxu0 0.0
  %123 = vmatpush.msra.mxu0 0.0
  %124 = vmatpush.msra.mxu0 0.0
  %125 = vmatpush.msra.mxu0 0.0
  %126 = vmatpush.msra.mxu0 0.0
  %127 = vmatpush.msra.mxu0 0.0
  %128 = vmatpush.msra.mxu0 0.0
  %129 = vmatpush.msra.mxu0 0.0
  %130 = vmatpush.msra.mxu0 %v111
  %131 = vmatpush.msra.mxu0 %v109
  %132 = vmatpush.msra.mxu0 %v107
  %133 = vmatpush.msra.mxu0 %v105
  %134 = vmatmul.f32.gmra.mxu0 %v116
  %v135 = vpop.f32.mrf.mxu0
  %v136 = vadd.f32 0.0, %v135
  %137 = vdwg.mxu0
  %138 = vmatpush.msra.mxu0 0.0
  %139 = vmatpush.msra.mxu0 0.0
  %140 = vmatpush.msra.mxu0 0.0
  %141 = vmatpush.msra.mxu0 0.0
  %142 = vmatpush.msra.mxu0 0.0
  %143 = vmatpush.msra.mxu0 0.0
  %144 = vmatpush.msra.mxu0 0.0
  %145 = vmatpush.msra.mxu0 0.0
  %146 = vmatpush.msra.mxu0 0.0
  %147 = vmatpush.msra.mxu0 0.0
  %148 = vmatpush.msra.mxu0 0.0
  %149 = vmatpush.msra.mxu0 0.0
  %150 = vmatpush.msra.mxu0 %v112
  %151 = vmatpush.msra.mxu0 %v110
  %152 = vmatpush.msra.mxu0 %v108
  %153 = vmatpush.msra.mxu0 %v106
  %154 = vmatmul.f32.gmra.mxu0 %v116
  %v155 = vpop.f32.mrf.mxu0
  %v156 = vadd.f32 0.0, %v155
  %157 = vdwg.mxu0
  %v158 = vmax.f32 %v136, 0.0
  %v159 = vmax.f32 %v156, 0.0
  %v160 = vlaneseq
  %v161 = vand.u32 %v160, 127
  %vm162 = vcmp.ge.s32.totalorder %v161, 0
  %vm163 = vcmp.lt.s32.totalorder %v161, 75
  %vm164 = vmand %vm162, %vm163
  %v165 = vsel %vm164, %v158, 0.0
  %166 = vmax.xlane.f32.xlu0 %v165
  %v167 = vpop.xlane.xlu0 %166
  %v168 = vsel %vm164, %v159, 0.0
  %169 = vmax.xlane.f32.xlu0 %v168
  %v170 = vpop.xlane.xlu0 %169
  %vm171 = vcmp.lt.s32.totalorder %v161, 2
  %v172 = vsel %vm171, %v167, %v170
  %v173 = vld [vmem:[%s1 + $0x28] sm:$0xff]
  %v174 = vmul.f32 %v172, %v173
  %v175 = vadd.f32 %v174, 0.0
  %vm176 = vcmp.ge.s32.totalorder %v161, 15
  %vm177 = vcmp.lt.s32.totalorder %v161, 90
  %vm178 = vmand %vm176, %vm177
  %v179 = vsel %vm178, %v158, 0.0
  %180 = vmax.xlane.f32.xlu0 %v179
  %v181 = vpop.xlane.xlu0 %180
  %v182 = vsel %vm178, %v159, 0.0
  %183 = vmax.xlane.f32.xlu0 %v182
  %v184 = vpop.xlane.xlu0 %183
  %v185 = vsel %vm171, %v181, %v184
  %v186 = vld [vmem:[%s1 + $0x30] sm:$0xff]
  %v187 = vmul.f32 %v185, %v186
  %v188 = vadd.f32 %v175, %v187
  %vm189 = vcmp.ge.s32.totalorder %v161, 30
  %vm190 = vcmp.lt.s32.totalorder %v161, 105
  %vm191 = vmand %vm189, %vm190
  %v192 = vsel %vm191, %v158, 0.0
  %193 = vmax.xlane.f32.xlu0 %v192
  %v194 = vpop.xlane.xlu0 %193
  %v195 = vsel %vm191, %v159, 0.0
  %196 = vmax.xlane.f32.xlu0 %v195
  %v197 = vpop.xlane.xlu0 %196
  %v198 = vsel %vm171, %v194, %v197
  %v199 = vld [vmem:[%s1 + $0x38] sm:$0xff]
  %v200 = vmul.f32 %v198, %v199
  %v201 = vadd.f32 %v188, %v200
  %vm202 = vcmp.ge.s32.totalorder %v161, 45
  %vm203 = vcmp.lt.s32.totalorder %v161, 120
  %vm204 = vmand %vm202, %vm203
  %v205 = vsel %vm204, %v158, 0.0
  %206 = vmax.xlane.f32.xlu0 %v205
  %v207 = vpop.xlane.xlu0 %206
  %v208 = vsel %vm204, %v159, 0.0
  %209 = vmax.xlane.f32.xlu0 %v208
  %v210 = vpop.xlane.xlu0 %209
  %v211 = vsel %vm171, %v207, %v210
  %v212 = vld [vmem:[%s1 + $0x40] sm:$0xff]
  %v213 = vmul.f32 %v211, %v212
  %v214 = vadd.f32 %v201, %v213
  %v215 = vrot.slane %v214, 4
  %v216 = vadd.f32 %v214, %v215
  %v217 = vrot.slane %v216, 2
  %v218 = vadd.f32 %v216, %v217
  %v219 = vrot.slane %v218, 1
  %v220 = vadd.f32 %v218, %v219
  %v221 = vld [vmem:[%s1 + $0x48] sm:$0x1]
  %v222 = vadd.f32 %v220, %v221
  %223 = vst [vmem:[%s2] sm:$0x1] %v222
  // Predicated region
  $region10: #{shallow_convnet_forward.1} parent=0 // pred_check
    _
  $region11: #{shallow_convnet_forward.1} parent=0 // pred_check_branch
    %225 = sbr.rel (0) target = $region13
  $region12: #{shallow_convnet_forward.1} parent=0 // pred_region
    _
  $region13: #{shallow_convnet_forward.1} parent=0 // pred_fallthru
    _
  // Predicated region
  $region14: #{shallow_convnet_forward.1} parent=0 // pred_check
    _
  $region15: #{shallow_convnet_forward.1} parent=0 // pred_check_branch
    %227 = sbr.rel (0) target = $region17
  $region16: #{shallow_convnet_forward.1} parent=0 // pred_region
    _
  $region17: #{shallow_convnet_forward.1} parent=0 // pred_fallthru
    _

</llo_original>
